<compile_context>
chip_gen: v7x
topology: tpu7x:2x2x1
jax: 0.10.0
libtpu: 0.0.40
codegen_flags: <defaults>
</compile_context>

<pallas_src>
import math

import numpy as np

import jax
import jax.numpy as jnp
from jax.experimental import pallas as pl
from jax.experimental.pallas import tpu as pltpu

# SABRBackwardModel default constructor parameters (deterministic, in-script).
R = 0.0
Q = 0.0
BETA = 1.0
RHO = -0.7
VOLVOL = 0.3
MONEYNESS_GRID = (0.7, 0.85, 1.0, 1.15, 1.3)
TTM_GRID = (0.08333, 0.25, 0.5, 1.0, 2.0)  # NOTE: the torch code uses the loop *index* t in the math
T_LEN = len(TTM_GRID)
M_LEN = len(MONEYNESS_GRID)
TM = T_LEN * M_LEN

_LANE = 128            # TPU lane width
_WIDE_C = 512          # lane width for non-tiny problems
_MAX_BN = 128          # rows per block: f32 out block 25*128*512*4B ~ 6.25 MiB (x2 buffers)
_VMEM_LIMIT = 28 << 20  # explicit scoped-VMEM limit: fits everywhere, covers bn=128 pipeline


def _recip(x):
    """EUP approx reciprocal + 1 Newton step (~23-24 mantissa bits), no divide.

    NOTE: x == 0 yields NaN where a true divide gives inf; SABR vols are strictly
    positive in practice and padding lanes use vol = price = 1.
    """
    r = pl.reciprocal(x, approx=True)
    return r * (2.0 - x * r)


def _sabr_kernel(vol_ref, price_ref, out_ref):
    """One (bn, C) tile of paths*periods -> all T*M surfaces, lane-dense stores."""
    vol = vol_ref[...]      # (bn, C) float32
    price = price_ref[...]  # (bn, C) float32
    odt = out_ref.dtype

    inv_vol = _recip(vol)   # one reciprocal per tile instead of 25 divides

    if BETA == 1.0 and R == Q:
        # Default-parameter fast path.  With beta == 1 and r == q:
        #   F == price, x == 1, y == 0, A == vol, F**(1-beta) == 1,
        #   log(F/K) == -log(m)                       (t-independent)
        # so Phi, Chi, 1/(Chi+1e-8) and the F == K mask depend only on m.
        # Precompute a "safe" factor per non-ATM m ONCE per tile; fold the
        # F == K select into it (vb * 1.0 == vb exactly), so every general
        # surface is just vb_t * pr[m] and every ATM surface is vb_t.
        pr = {}
        for m in set(MONEYNESS_GRID):
            if m == 1.0:
                continue
            log_fk = -math.log(m)                          # compile-time scalar
            phi = jnp.float32(VOLVOL * log_fk) * inv_vol
            chi = jnp.log(
                (jnp.sqrt(1.0 - (2.0 * RHO) * phi + phi * phi) + phi - RHO)
                * jnp.float32(1.0 / (1.0 - RHO))
            )
            prm = phi * _recip(chi + 1e-8)
            # F == K  <=>  price*m == price (only price in {0, +-inf}); t-independent.
            pr[m] = jnp.where(price * jnp.float32(m) == price, jnp.float32(1.0), prm)

        for t in range(T_LEN):
            # B does not depend on moneyness when beta == 1 -> one fma per t.
            b_const = 1.0 + t * (VOLVOL * VOLVOL * (2.0 - 3.0 * RHO * RHO) / 24.0)
            b_lin = t * RHO * BETA * VOLVOL / 4.0
            vb = vol * (jnp.float32(b_const) + jnp.float32(b_lin) * vol)  # == A*B == ATM value
            for i, m in enumerate(MONEYNESS_GRID):
                idx = t * M_LEN + i
                if m == 1.0:
                    out_ref[idx, :, :] = vb.astype(odt)
                else:
                    out_ref[idx, :, :] = (vb * pr[m]).astype(odt)

    elif BETA == 1.0:
        # beta == 1 but r != q (dead with default params): log(F/K) depends on t.
        for t in range(T_LEN):
            c_t = float(np.exp(np.float32((R - Q) * t)))
            b_const = 1.0 + t * (VOLVOL * VOLVOL * (2.0 - 3.0 * RHO * RHO) / 24.0)
            b_lin = t * RHO * BETA * VOLVOL / 4.0
            vb = vol * (jnp.float32(b_const) + jnp.float32(b_lin) * vol)
            F = price * jnp.float32(c_t)
            for i, m in enumerate(MONEYNESS_GRID):
                idx = t * M_LEN + i
                if (R - Q) * t == 0.0 and m == 1.0:
                    out_ref[idx, :, :] = vb.astype(odt)
                    continue
                log_fk = (R - Q) * t - math.log(m)
                phi = jnp.float32(VOLVOL * log_fk) * inv_vol
                chi = jnp.log(
                    (jnp.sqrt(1.0 - (2.0 * RHO) * phi + phi * phi) + phi - RHO)
                    * jnp.float32(1.0 / (1.0 - RHO))
                )
                general = vb * phi * _recip(chi + 1e-8)
                eq = F == price * jnp.float32(m)
                out_ref[idx, :, :] = jnp.where(eq, vb, general).astype(odt)

    else:
        # General-beta path (dead with default params): only one data pow per tile.
        px = price ** jnp.float32(1.0 - BETA)
        inv_px = _recip(px)
        for t in range(T_LEN):
            c_t = float(np.exp(np.float32((R - Q) * t)))
            F = price * jnp.float32(c_t)
            for i, m in enumerate(MONEYNESS_GRID):
                idx = t * M_LEN + i
                log_fk = (R - Q) * t - math.log(m)
                sx = (c_t * m) ** ((1.0 - BETA) / 2.0)     # x = price**(1-beta) * sx
                y = (1.0 - BETA) * log_fk
                inv_a_den = 1.0 / (1.0 + y * y / 24.0 + y ** 4 / 1920.0)
                x = px * jnp.float32(sx)
                inv_x = inv_px * jnp.float32(1.0 / sx)
                A = vol * inv_x * jnp.float32(inv_a_den)
                B = 1.0 + t * (
                    ((1.0 - BETA) ** 2 / 24.0) * (vol * vol) * (inv_x * inv_x)
                    + (RHO * BETA * VOLVOL / 4.0) * vol * inv_x
                    + VOLVOL * VOLVOL * (2.0 - 3.0 * RHO * RHO) / 24.0
                )
                phi = jnp.float32(VOLVOL * log_fk) * x * inv_vol
                chi = jnp.log(
                    (jnp.sqrt(1.0 - (2.0 * RHO) * phi + phi * phi) + phi - RHO)
                    * jnp.float32(1.0 / (1.0 - RHO))
                )
                general = A * B * phi * _recip(chi + 1e-8)
                atm = vol * B * inv_px * jnp.float32(c_t ** (-(1.0 - BETA)))
                eq = F == price * jnp.float32(m)
                out_ref[idx, :, :] = jnp.where(eq, atm, general).astype(odt)


def _choose_tiling(num_elems):
    """Pick a lane-dense (rows, C) layout plus a row-block size bn.

    Guarantees >= 2 row-blocks whenever rows > 8 so the "parallel" grid axis can
    shard across both v7x TensorCores (free ~2x for medium sizes).
    """
    C = _WIDE_C if num_elems >= _WIDE_C else _LANE
    rows = -(-num_elems // C)
    if rows <= _MAX_BN:
        if rows > 8:
            half = (rows + 1) // 2
            bn = ((half + 7) // 8) * 8          # sublane-aligned half split
            rows_padded = 2 * bn
        else:
            bn = rows                           # single block == full rows dim -> legal
            rows_padded = rows
    else:
        bn = _MAX_BN
        rows_padded = -(-rows // bn) * bn
    return C, rows_padded, bn


def sabr_backward_forward(vol, price, out_dtype=jnp.float32):
    """Pallas implementation of SABRBackwardModel.forward.

    Args:
        vol:   (num_path, num_period) float32
        price: (num_path, num_period) float32
        out_dtype: output dtype.  float32 matches the PyTorch module; jnp.bfloat16
            halves the dominant 25x output HBM stream on write-bound v5e/v6e.
    Returns:
        (num_path, num_period, len(TTM_GRID), len(MONEYNESS_GRID)) out_dtype
    """
    vol = vol.astype(jnp.float32)
    price = price.astype(jnp.float32)
    N, P = vol.shape
    L = N * P

    C, rows, bn = _choose_tiling(L)
    Lp = rows * C

    # Pad with benign values (vol = price = 1) so padded lanes never hit log(0) or 0-div.
    v2d = jnp.pad(vol.reshape(-1), (0, Lp - L), constant_values=1.0).reshape(rows, C)
    p2d = jnp.pad(price.reshape(-1), (0, Lp - L), constant_values=1.0).reshape(rows, C)

    grid = (rows // bn,)

    out_tm = pl.pallas_call(
        _sabr_kernel,
        out_shape=jax.ShapeDtypeStruct((TM, rows, C), out_dtype),
        grid_spec=pltpu.PrefetchScalarGridSpec(
            num_scalar_prefetch=0,
            grid=grid,
            in_specs=[
                pl.BlockSpec((bn, C), lambda n: (n, 0)),
                pl.BlockSpec((bn, C), lambda n: (n, 0)),
            ],
            out_specs=pl.BlockSpec((TM, bn, C), lambda n: (0, n, 0)),
        ),
        compiler_params=pltpu.CompilerParams(
            dimension_semantics=("parallel",),   # row-blocks shard across TCs on v7x megacore
            vmem_limit_bytes=_VMEM_LIMIT,        # bn=128 double-buffered blocks > v5e default
        ),
    )(v2d, p2d)

    # NOTE(perf): downstream consumers that can accept the (T, M, N, P) layout should use
    # `out_tm` directly -- the un-pad slice + transpose below re-streams the full 25x
    # result through HBM once more (it fuses into a single XLA transpose pass).
    out = out_tm.reshape(TM, Lp)[:, :L].reshape(T_LEN, M_LEN, N, P)
    return jnp.transpose(out, (2, 3, 0, 1))


def _reference(vol, price):
    """Pure-JAX reference mirroring the PyTorch loop, for validation."""
    N, P = vol.shape
    out = jnp.zeros((N, P, T_LEN, M_LEN), jnp.float32)
    for t in range(T_LEN):
        F = price * jnp.exp(jnp.float32((R - Q) * t))
        for i, m in enumerate(MONEYNESS_GRID):
            K = price * m
            x = (F * K) ** ((1.0 - BETA) / 2.0)
            y = (1.0 - BETA) * jnp.log(F / K)
            A = vol / (x * (1.0 + y * y / 24.0 + y ** 4 / 1920.0))
            B = 1.0 + t * (
                (1.0 - BETA) ** 2 * (vol * vol) / (24.0 * x * x)
                + RHO * BETA * VOLVOL * vol / (4.0 * x)
                + VOLVOL * VOLVOL * (2.0 - 3.0 * RHO * RHO) / 24.0
            )
            Phi = VOLVOL * x / vol * jnp.log(F / K)
            Chi = jnp.log(
                (jnp.sqrt(1.0 - 2.0 * RHO * Phi + Phi * Phi) + Phi - RHO) / (1.0 - RHO)
            )
            iv = jnp.where(F == K, vol * B / F ** (1.0 - BETA), A * B * Phi / (Chi + 1e-8))
            out = out.at[:, :, t, i].set(iv)
    return out


if __name__ == "__main__":
    key = jax.random.PRNGKey(0)
    k_vol, k_price = jax.random.split(key)

    # Small case (matches the module's documented input shapes).
    num_path, num_period = 2, 8
    vol = 0.2 + 0.05 * jax.random.uniform(k_vol, (num_path, num_period), jnp.float32)
    price = 100.0 * jnp.exp(0.02 * jax.random.normal(k_price, (num_path, num_period), jnp.float32))

    out = jax.block_until_ready(sabr_backward_forward(vol, price))
    ref = _reference(vol, price)
    assert out.shape == (num_path, num_period, T_LEN, M_LEN)
    assert jnp.allclose(out, ref, rtol=3e-5, atol=1e-6), "small-case mismatch vs reference"

    # Medium case exercising the split-into-two-row-blocks path (grid == 2, tail padding).
    k2v, k2p = jax.random.split(jax.random.PRNGKey(0))
    np2, pp2 = 48, 700  # 33600 elements -> rows=66 -> two (40, 512) row-blocks
    vol2 = 0.2 + 0.05 * jax.random.uniform(k2v, (np2, pp2), jnp.float32)
    price2 = 100.0 * jnp.exp(0.02 * jax.random.normal(k2p, (np2, pp2), jnp.float32))
    out2 = jax.block_until_ready(sabr_backward_forward(vol2, price2))
    ref2 = _reference(vol2, price2)
    assert jnp.allclose(out2, ref2, rtol=3e-5, atol=1e-6), "split-tiled mismatch vs reference"

    # Larger case exercising the bn = _MAX_BN multi-block path.
    k3v, k3p = jax.random.split(jax.random.PRNGKey(1))
    np3, pp3 = 80, 900  # 72000 elements -> rows=141 -> two (128, 512) row-blocks
    vol3 = 0.2 + 0.05 * jax.random.uniform(k3v, (np3, pp3), jnp.float32)
    price3 = 100.0 * jnp.exp(0.02 * jax.random.normal(k3p, (np3, pp3), jnp.float32))
    out3 = jax.block_until_ready(sabr_backward_forward(vol3, price3))
    ref3 = _reference(vol3, price3)
    assert jnp.allclose(out3, ref3, rtol=3e-5, atol=1e-6), "max-bn-tiled mismatch vs reference"

    # Optional bf16-output path (halves the output HBM stream on v5e/v6e); looser tolerance.
    out_bf16 = jax.block_until_ready(sabr_backward_forward(vol, price, out_dtype=jnp.bfloat16))
    assert jnp.allclose(out_bf16.astype(jnp.float32), ref, rtol=2e-2, atol=1e-3), "bf16 mismatch"

    print("KERNEL_OK")
</pallas_src>

<mosaic_0001>
module attributes {stable_mosaic.version = 11 : i64} {
  func.func @_sabr_kernel(%arg0: i32, %arg1: memref<1x128xf32, #tpu.memory_space<vmem>>, %arg2: memref<1x128xf32, #tpu.memory_space<vmem>>, %arg3: memref<25x1x128xf32, #tpu.memory_space<vmem>>) attributes {dimension_semantics = [#tpu.dimension_semantics<parallel>], iteration_bounds = array<i64: 1>, scalar_prefetch = 0 : i64, scratch_operands = 0 : i64, tpu.core_type = #tpu.core_type<tc>, window_params = [{transform_indices = @transform_0, window_bounds = array<i64: 1, 128>}, {transform_indices = @transform_1, window_bounds = array<i64: 1, 128>}, {transform_indices = @transform_2, window_bounds = array<i64: 25, 1, 128>}]} {
    %c0 = arith.constant 0 : index
    %c0_0 = arith.constant 0 : index
    %0 = vector.load %arg1[%c0, %c0_0] : memref<1x128xf32, #tpu.memory_space<vmem>>, vector<1x128xf32>
    %c0_1 = arith.constant 0 : index
    %c0_2 = arith.constant 0 : index
    %1 = vector.load %arg2[%c0_1, %c0_2] : memref<1x128xf32, #tpu.memory_space<vmem>>, vector<1x128xf32>
    %2 = tpu.reciprocal %0 {approx = true} : vector<1x128xf32> -> vector<1x128xf32>
    %3 = arith.mulf %0, %2 : vector<1x128xf32>
    %cst = arith.constant 2.000000e+00 : f32
    %4 = vector.broadcast %cst : f32 to vector<1x128xf32>
    %5 = arith.subf %4, %3 : vector<1x128xf32>
    %6 = arith.mulf %2, %5 : vector<1x128xf32>
    %cst_3 = arith.constant 0.107002482 : f32
    %7 = vector.broadcast %cst_3 : f32 to vector<1x128xf32>
    %8 = arith.mulf %7, %6 : vector<1x128xf32>
    %cst_4 = arith.constant -1.400000e+00 : f32
    %9 = vector.broadcast %cst_4 : f32 to vector<1x128xf32>
    %10 = arith.mulf %9, %8 : vector<1x128xf32>
    %cst_5 = arith.constant 1.000000e+00 : f32
    %11 = vector.broadcast %cst_5 : f32 to vector<1x128xf32>
    %12 = arith.subf %11, %10 : vector<1x128xf32>
    %13 = arith.mulf %8, %8 : vector<1x128xf32>
    %14 = arith.addf %12, %13 : vector<1x128xf32>
    %15 = math.sqrt %14 : vector<1x128xf32>
    %16 = arith.addf %15, %8 : vector<1x128xf32>
    %cst_6 = arith.constant -0.699999988 : f32
    %17 = vector.broadcast %cst_6 : f32 to vector<1x128xf32>
    %18 = arith.subf %16, %17 : vector<1x128xf32>
    %cst_7 = arith.constant 0.588235319 : f32
    %19 = vector.broadcast %cst_7 : f32 to vector<1x128xf32>
    %20 = arith.mulf %18, %19 : vector<1x128xf32>
    %21 = math.log %20 : vector<1x128xf32>
    %cst_8 = arith.constant 9.99999993E-9 : f32
    %22 = vector.broadcast %cst_8 : f32 to vector<1x128xf32>
    %23 = arith.addf %21, %22 : vector<1x128xf32>
    %24 = tpu.reciprocal %23 {approx = true} : vector<1x128xf32> -> vector<1x128xf32>
    %25 = arith.mulf %23, %24 : vector<1x128xf32>
    %cst_9 = arith.constant 2.000000e+00 : f32
    %26 = vector.broadcast %cst_9 : f32 to vector<1x128xf32>
    %27 = arith.subf %26, %25 : vector<1x128xf32>
    %28 = arith.mulf %24, %27 : vector<1x128xf32>
    %29 = arith.mulf %8, %28 : vector<1x128xf32>
    %cst_10 = arith.constant 0.699999988 : f32
    %30 = vector.broadcast %cst_10 : f32 to vector<1x128xf32>
    %31 = arith.mulf %1, %30 : vector<1x128xf32>
    %32 = arith.cmpf oeq, %31, %1 : vector<1x128xf32>
    %cst_11 = arith.constant 1.000000e+00 : f32
    %33 = vector.broadcast %cst_11 : f32 to vector<1x128xf32>
    %34 = arith.select %32, %33, %29 : vector<1x128xi1>, vector<1x128xf32>
    %cst_12 = arith.constant 0.0487556793 : f32
    %35 = vector.broadcast %cst_12 : f32 to vector<1x128xf32>
    %36 = arith.mulf %35, %6 : vector<1x128xf32>
    %cst_13 = arith.constant -1.400000e+00 : f32
    %37 = vector.broadcast %cst_13 : f32 to vector<1x128xf32>
    %38 = arith.mulf %37, %36 : vector<1x128xf32>
    %cst_14 = arith.constant 1.000000e+00 : f32
    %39 = vector.broadcast %cst_14 : f32 to vector<1x128xf32>
    %40 = arith.subf %39, %38 : vector<1x128xf32>
    %41 = arith.mulf %36, %36 : vector<1x128xf32>
    %42 = arith.addf %40, %41 : vector<1x128xf32>
    %43 = math.sqrt %42 : vector<1x128xf32>
    %44 = arith.addf %43, %36 : vector<1x128xf32>
    %cst_15 = arith.constant -0.699999988 : f32
    %45 = vector.broadcast %cst_15 : f32 to vector<1x128xf32>
    %46 = arith.subf %44, %45 : vector<1x128xf32>
    %cst_16 = arith.constant 0.588235319 : f32
    %47 = vector.broadcast %cst_16 : f32 to vector<1x128xf32>
    %48 = arith.mulf %46, %47 : vector<1x128xf32>
    %49 = math.log %48 : vector<1x128xf32>
    %cst_17 = arith.constant 9.99999993E-9 : f32
    %50 = vector.broadcast %cst_17 : f32 to vector<1x128xf32>
    %51 = arith.addf %49, %50 : vector<1x128xf32>
    %52 = tpu.reciprocal %51 {approx = true} : vector<1x128xf32> -> vector<1x128xf32>
    %53 = arith.mulf %51, %52 : vector<1x128xf32>
    %cst_18 = arith.constant 2.000000e+00 : f32
    %54 = vector.broadcast %cst_18 : f32 to vector<1x128xf32>
    %55 = arith.subf %54, %53 : vector<1x128xf32>
    %56 = arith.mulf %52, %55 : vector<1x128xf32>
    %57 = arith.mulf %36, %56 : vector<1x128xf32>
    %cst_19 = arith.constant 8.500000e-01 : f32
    %58 = vector.broadcast %cst_19 : f32 to vector<1x128xf32>
    %59 = arith.mulf %1, %58 : vector<1x128xf32>
    %60 = arith.cmpf oeq, %59, %1 : vector<1x128xf32>
    %cst_20 = arith.constant 1.000000e+00 : f32
    %61 = vector.broadcast %cst_20 : f32 to vector<1x128xf32>
    %62 = arith.select %60, %61, %57 : vector<1x128xi1>, vector<1x128xf32>
    %cst_21 = arith.constant -0.0419285819 : f32
    %63 = vector.broadcast %cst_21 : f32 to vector<1x128xf32>
    %64 = arith.mulf %63, %6 : vector<1x128xf32>
    %cst_22 = arith.constant -1.400000e+00 : f32
    %65 = vector.broadcast %cst_22 : f32 to vector<1x128xf32>
    %66 = arith.mulf %65, %64 : vector<1x128xf32>
    %cst_23 = arith.constant 1.000000e+00 : f32
    %67 = vector.broadcast %cst_23 : f32 to vector<1x128xf32>
    %68 = arith.subf %67, %66 : vector<1x128xf32>
    %69 = arith.mulf %64, %64 : vector<1x128xf32>
    %70 = arith.addf %68, %69 : vector<1x128xf32>
    %71 = math.sqrt %70 : vector<1x128xf32>
    %72 = arith.addf %71, %64 : vector<1x128xf32>
    %cst_24 = arith.constant -0.699999988 : f32
    %73 = vector.broadcast %cst_24 : f32 to vector<1x128xf32>
    %74 = arith.subf %72, %73 : vector<1x128xf32>
    %cst_25 = arith.constant 0.588235319 : f32
    %75 = vector.broadcast %cst_25 : f32 to vector<1x128xf32>
    %76 = arith.mulf %74, %75 : vector<1x128xf32>
    %77 = math.log %76 : vector<1x128xf32>
    %cst_26 = arith.constant 9.99999993E-9 : f32
    %78 = vector.broadcast %cst_26 : f32 to vector<1x128xf32>
    %79 = arith.addf %77, %78 : vector<1x128xf32>
    %80 = tpu.reciprocal %79 {approx = true} : vector<1x128xf32> -> vector<1x128xf32>
    %81 = arith.mulf %79, %80 : vector<1x128xf32>
    %cst_27 = arith.constant 2.000000e+00 : f32
    %82 = vector.broadcast %cst_27 : f32 to vector<1x128xf32>
    %83 = arith.subf %82, %81 : vector<1x128xf32>
    %84 = arith.mulf %80, %83 : vector<1x128xf32>
    %85 = arith.mulf %64, %84 : vector<1x128xf32>
    %cst_28 = arith.constant 1.150000e+00 : f32
    %86 = vector.broadcast %cst_28 : f32 to vector<1x128xf32>
    %87 = arith.mulf %1, %86 : vector<1x128xf32>
    %88 = arith.cmpf oeq, %87, %1 : vector<1x128xf32>
    %cst_29 = arith.constant 1.000000e+00 : f32
    %89 = vector.broadcast %cst_29 : f32 to vector<1x128xf32>
    %90 = arith.select %88, %89, %85 : vector<1x128xi1>, vector<1x128xf32>
    %cst_30 = arith.constant -0.0787092819 : f32
    %91 = vector.broadcast %cst_30 : f32 to vector<1x128xf32>
    %92 = arith.mulf %91, %6 : vector<1x128xf32>
    %cst_31 = arith.constant -1.400000e+00 : f32
    %93 = vector.broadcast %cst_31 : f32 to vector<1x128xf32>
    %94 = arith.mulf %93, %92 : vector<1x128xf32>
    %cst_32 = arith.constant 1.000000e+00 : f32
    %95 = vector.broadcast %cst_32 : f32 to vector<1x128xf32>
    %96 = arith.subf %95, %94 : vector<1x128xf32>
    %97 = arith.mulf %92, %92 : vector<1x128xf32>
    %98 = arith.addf %96, %97 : vector<1x128xf32>
    %99 = math.sqrt %98 : vector<1x128xf32>
    %100 = arith.addf %99, %92 : vector<1x128xf32>
    %cst_33 = arith.constant -0.699999988 : f32
    %101 = vector.broadcast %cst_33 : f32 to vector<1x128xf32>
    %102 = arith.subf %100, %101 : vector<1x128xf32>
    %cst_34 = arith.constant 0.588235319 : f32
    %103 = vector.broadcast %cst_34 : f32 to vector<1x128xf32>
    %104 = arith.mulf %102, %103 : vector<1x128xf32>
    %105 = math.log %104 : vector<1x128xf32>
    %cst_35 = arith.constant 9.99999993E-9 : f32
    %106 = vector.broadcast %cst_35 : f32 to vector<1x128xf32>
    %107 = arith.addf %105, %106 : vector<1x128xf32>
    %108 = tpu.reciprocal %107 {approx = true} : vector<1x128xf32> -> vector<1x128xf32>
    %109 = arith.mulf %107, %108 : vector<1x128xf32>
    %cst_36 = arith.constant 2.000000e+00 : f32
    %110 = vector.broadcast %cst_36 : f32 to vector<1x128xf32>
    %111 = arith.subf %110, %109 : vector<1x128xf32>
    %112 = arith.mulf %108, %111 : vector<1x128xf32>
    %113 = arith.mulf %92, %112 : vector<1x128xf32>
    %cst_37 = arith.constant 1.300000e+00 : f32
    %114 = vector.broadcast %cst_37 : f32 to vector<1x128xf32>
    %115 = arith.mulf %1, %114 : vector<1x128xf32>
    %116 = arith.cmpf oeq, %115, %1 : vector<1x128xf32>
    %cst_38 = arith.constant 1.000000e+00 : f32
    %117 = vector.broadcast %cst_38 : f32 to vector<1x128xf32>
    %118 = arith.select %116, %117, %113 : vector<1x128xi1>, vector<1x128xf32>
    %cst_39 = arith.constant -0.000000e+00 : f32
    %119 = vector.broadcast %cst_39 : f32 to vector<1x128xf32>
    %120 = arith.mulf %119, %0 : vector<1x128xf32>
    %cst_40 = arith.constant 1.000000e+00 : f32
    %121 = vector.broadcast %cst_40 : f32 to vector<1x128xf32>
    %122 = arith.addf %121, %120 : vector<1x128xf32>
    %123 = arith.mulf %0, %122 : vector<1x128xf32>
    %124 = arith.mulf %123, %34 : vector<1x128xf32>
    %c0_41 = arith.constant 0 : index
    %c0_42 = arith.constant 0 : index
    %c0_43 = arith.constant 0 : index
    %125 = vector.load %arg3[%c0_41, %c0_42, %c0_43] : memref<25x1x128xf32, #tpu.memory_space<vmem>>, vector<1x1x128xf32>
    %126 = vector.shape_cast %125 : vector<1x1x128xf32> to vector<1x128xf32>
    %127 = vector.shape_cast %124 : vector<1x128xf32> to vector<1x1x128xf32>
    tpu.vector_store %arg3[%c0_41, %c0_42, %c0_43], %127 {strides = array<i32>} : memref<25x1x128xf32, #tpu.memory_space<vmem>>, vector<1x1x128xf32>,
    %128 = arith.mulf %123, %62 : vector<1x128xf32>
    %c1 = arith.constant 1 : index
    %c0_44 = arith.constant 0 : index
    %c0_45 = arith.constant 0 : index
    %129 = vector.load %arg3[%c1, %c0_44, %c0_45] : memref<25x1x128xf32, #tpu.memory_space<vmem>>, vector<1x1x128xf32>
    %130 = vector.shape_cast %129 : vector<1x1x128xf32> to vector<1x128xf32>
    %131 = vector.shape_cast %128 : vector<1x128xf32> to vector<1x1x128xf32>
    tpu.vector_store %arg3[%c1, %c0_44, %c0_45], %131 {strides = array<i32>} : memref<25x1x128xf32, #tpu.memory_space<vmem>>, vector<1x1x128xf32>,
    %c2 = arith.constant 2 : index
    %c0_46 = arith.constant 0 : index
    %c0_47 = arith.constant 0 : index
    %132 = vector.load %arg3[%c2, %c0_46, %c0_47] : memref<25x1x128xf32, #tpu.memory_space<vmem>>, vector<1x1x128xf32>
    %133 = vector.shape_cast %132 : vector<1x1x128xf32> to vector<1x128xf32>
    %134 = vector.shape_cast %123 : vector<1x128xf32> to vector<1x1x128xf32>
    tpu.vector_store %arg3[%c2, %c0_46, %c0_47], %134 {strides = array<i32>} : memref<25x1x128xf32, #tpu.memory_space<vmem>>, vector<1x1x128xf32>,
    %135 = arith.mulf %123, %90 : vector<1x128xf32>
    %c3 = arith.constant 3 : index
    %c0_48 = arith.constant 0 : index
    %c0_49 = arith.constant 0 : index
    %136 = vector.load %arg3[%c3, %c0_48, %c0_49] : memref<25x1x128xf32, #tpu.memory_space<vmem>>, vector<1x1x128xf32>
    %137 = vector.shape_cast %136 : vector<1x1x128xf32> to vector<1x128xf32>
    %138 = vector.shape_cast %135 : vector<1x128xf32> to vector<1x1x128xf32>
    tpu.vector_store %arg3[%c3, %c0_48, %c0_49], %138 {strides = array<i32>} : memref<25x1x128xf32, #tpu.memory_space<vmem>>, vector<1x1x128xf32>,
    %139 = arith.mulf %123, %118 : vector<1x128xf32>
    %c4 = arith.constant 4 : index
    %c0_50 = arith.constant 0 : index
    %c0_51 = arith.constant 0 : index
    %140 = vector.load %arg3[%c4, %c0_50, %c0_51] : memref<25x1x128xf32, #tpu.memory_space<vmem>>, vector<1x1x128xf32>
    %141 = vector.shape_cast %140 : vector<1x1x128xf32> to vector<1x128xf32>
    %142 = vector.shape_cast %139 : vector<1x128xf32> to vector<1x1x128xf32>
    tpu.vector_store %arg3[%c4, %c0_50, %c0_51], %142 {strides = array<i32>} : memref<25x1x128xf32, #tpu.memory_space<vmem>>, vector<1x1x128xf32>,
    %cst_52 = arith.constant -5.250000e-02 : f32
    %143 = vector.broadcast %cst_52 : f32 to vector<1x128xf32>
    %144 = arith.mulf %143, %0 : vector<1x128xf32>
    %cst_53 = arith.constant 1.00198746 : f32
    %145 = vector.broadcast %cst_53 : f32 to vector<1x128xf32>
    %146 = arith.addf %145, %144 : vector<1x128xf32>
    %147 = arith.mulf %0, %146 : vector<1x128xf32>
    %148 = arith.mulf %147, %34 : vector<1x128xf32>
    %c5 = arith.constant 5 : index
    %c0_54 = arith.constant 0 : index
    %c0_55 = arith.constant 0 : index
    %149 = vector.load %arg3[%c5, %c0_54, %c0_55] : memref<25x1x128xf32, #tpu.memory_space<vmem>>, vector<1x1x128xf32>
    %150 = vector.shape_cast %149 : vector<1x1x128xf32> to vector<1x128xf32>
    %151 = vector.shape_cast %148 : vector<1x128xf32> to vector<1x1x128xf32>
    tpu.vector_store %arg3[%c5, %c0_54, %c0_55], %151 {strides = array<i32>} : memref<25x1x128xf32, #tpu.memory_space<vmem>>, vector<1x1x128xf32>,
    %152 = arith.mulf %147, %62 : vector<1x128xf32>
    %c6 = arith.constant 6 : index
    %c0_56 = arith.constant 0 : index
    %c0_57 = arith.constant 0 : index
    %153 = vector.load %arg3[%c6, %c0_56, %c0_57] : memref<25x1x128xf32, #tpu.memory_space<vmem>>, vector<1x1x128xf32>
    %154 = vector.shape_cast %153 : vector<1x1x128xf32> to vector<1x128xf32>
    %155 = vector.shape_cast %152 : vector<1x128xf32> to vector<1x1x128xf32>
    tpu.vector_store %arg3[%c6, %c0_56, %c0_57], %155 {strides = array<i32>} : memref<25x1x128xf32, #tpu.memory_space<vmem>>, vector<1x1x128xf32>,
    %c7 = arith.constant 7 : index
    %c0_58 = arith.constant 0 : index
    %c0_59 = arith.constant 0 : index
    %156 = vector.load %arg3[%c7, %c0_58, %c0_59] : memref<25x1x128xf32, #tpu.memory_space<vmem>>, vector<1x1x128xf32>
    %157 = vector.shape_cast %156 : vector<1x1x128xf32> to vector<1x128xf32>
    %158 = vector.shape_cast %147 : vector<1x128xf32> to vector<1x1x128xf32>
    tpu.vector_store %arg3[%c7, %c0_58, %c0_59], %158 {strides = array<i32>} : memref<25x1x128xf32, #tpu.memory_space<vmem>>, vector<1x1x128xf32>,
    %159 = arith.mulf %147, %90 : vector<1x128xf32>
    %c8 = arith.constant 8 : index
    %c0_60 = arith.constant 0 : index
    %c0_61 = arith.constant 0 : index
    %160 = vector.load %arg3[%c8, %c0_60, %c0_61] : memref<25x1x128xf32, #tpu.memory_space<vmem>>, vector<1x1x128xf32>
    %161 = vector.shape_cast %160 : vector<1x1x128xf32> to vector<1x128xf32>
    %162 = vector.shape_cast %159 : vector<1x128xf32> to vector<1x1x128xf32>
    tpu.vector_store %arg3[%c8, %c0_60, %c0_61], %162 {strides = array<i32>} : memref<25x1x128xf32, #tpu.memory_space<vmem>>, vector<1x1x128xf32>,
    %163 = arith.mulf %147, %118 : vector<1x128xf32>
    %c9 = arith.constant 9 : index
    %c0_62 = arith.constant 0 : index
    %c0_63 = arith.constant 0 : index
    %164 = vector.load %arg3[%c9, %c0_62, %c0_63] : memref<25x1x128xf32, #tpu.memory_space<vmem>>, vector<1x1x128xf32>
    %165 = vector.shape_cast %164 : vector<1x1x128xf32> to vector<1x128xf32>
    %166 = vector.shape_cast %163 : vector<1x128xf32> to vector<1x1x128xf32>
    tpu.vector_store %arg3[%c9, %c0_62, %c0_63], %166 {strides = array<i32>} : memref<25x1x128xf32, #tpu.memory_space<vmem>>, vector<1x1x128xf32>,
    %cst_64 = arith.constant -1.050000e-01 : f32
    %167 = vector.broadcast %cst_64 : f32 to vector<1x128xf32>
    %168 = arith.mulf %167, %0 : vector<1x128xf32>
    %cst_65 = arith.constant 1.00397503 : f32
    %169 = vector.broadcast %cst_65 : f32 to vector<1x128xf32>
    %170 = arith.addf %169, %168 : vector<1x128xf32>
    %171 = arith.mulf %0, %170 : vector<1x128xf32>
    %172 = arith.mulf %171, %34 : vector<1x128xf32>
    %c10 = arith.constant 10 : index
    %c0_66 = arith.constant 0 : index
    %c0_67 = arith.constant 0 : index
    %173 = vector.load %arg3[%c10, %c0_66, %c0_67] : memref<25x1x128xf32, #tpu.memory_space<vmem>>, vector<1x1x128xf32>
    %174 = vector.shape_cast %173 : vector<1x1x128xf32> to vector<1x128xf32>
    %175 = vector.shape_cast %172 : vector<1x128xf32> to vector<1x1x128xf32>
    tpu.vector_store %arg3[%c10, %c0_66, %c0_67], %175 {strides = array<i32>} : memref<25x1x128xf32, #tpu.memory_space<vmem>>, vector<1x1x128xf32>,
    %176 = arith.mulf %171, %62 : vector<1x128xf32>
    %c11 = arith.constant 11 : index
    %c0_68 = arith.constant 0 : index
    %c0_69 = arith.constant 0 : index
    %177 = vector.load %arg3[%c11, %c0_68, %c0_69] : memref<25x1x128xf32, #tpu.memory_space<vmem>>, vector<1x1x128xf32>
    %178 = vector.shape_cast %177 : vector<1x1x128xf32> to vector<1x128xf32>
    %179 = vector.shape_cast %176 : vector<1x128xf32> to vector<1x1x128xf32>
    tpu.vector_store %arg3[%c11, %c0_68, %c0_69], %179 {strides = array<i32>} : memref<25x1x128xf32, #tpu.memory_space<vmem>>, vector<1x1x128xf32>,
    %c12 = arith.constant 12 : index
    %c0_70 = arith.constant 0 : index
    %c0_71 = arith.constant 0 : index
    %180 = vector.load %arg3[%c12, %c0_70, %c0_71] : memref<25x1x128xf32, #tpu.memory_space<vmem>>, vector<1x1x128xf32>
    %181 = vector.shape_cast %180 : vector<1x1x128xf32> to vector<1x128xf32>
    %182 = vector.shape_cast %171 : vector<1x128xf32> to vector<1x1x128xf32>
    tpu.vector_store %arg3[%c12, %c0_70, %c0_71], %182 {strides = array<i32>} : memref<25x1x128xf32, #tpu.memory_space<vmem>>, vector<1x1x128xf32>,
    %183 = arith.mulf %171, %90 : vector<1x128xf32>
    %c13 = arith.constant 13 : index
    %c0_72 = arith.constant 0 : index
    %c0_73 = arith.constant 0 : index
    %184 = vector.load %arg3[%c13, %c0_72, %c0_73] : memref<25x1x128xf32, #tpu.memory_space<vmem>>, vector<1x1x128xf32>
    %185 = vector.shape_cast %184 : vector<1x1x128xf32> to vector<1x128xf32>
    %186 = vector.shape_cast %183 : vector<1x128xf32> to vector<1x1x128xf32>
    tpu.vector_store %arg3[%c13, %c0_72, %c0_73], %186 {strides = array<i32>} : memref<25x1x128xf32, #tpu.memory_space<vmem>>, vector<1x1x128xf32>,
    %187 = arith.mulf %171, %118 : vector<1x128xf32>
    %c14 = arith.constant 14 : index
    %c0_74 = arith.constant 0 : index
    %c0_75 = arith.constant 0 : index
    %188 = vector.load %arg3[%c14, %c0_74, %c0_75] : memref<25x1x128xf32, #tpu.memory_space<vmem>>, vector<1x1x128xf32>
    %189 = vector.shape_cast %188 : vector<1x1x128xf32> to vector<1x128xf32>
    %190 = vector.shape_cast %187 : vector<1x128xf32> to vector<1x1x128xf32>
    tpu.vector_store %arg3[%c14, %c0_74, %c0_75], %190 {strides = array<i32>} : memref<25x1x128xf32, #tpu.memory_space<vmem>>, vector<1x1x128xf32>,
    %cst_76 = arith.constant -1.575000e-01 : f32
    %191 = vector.broadcast %cst_76 : f32 to vector<1x128xf32>
    %192 = arith.mulf %191, %0 : vector<1x128xf32>
    %cst_77 = arith.constant 1.00596249 : f32
    %193 = vector.broadcast %cst_77 : f32 to vector<1x128xf32>
    %194 = arith.addf %193, %192 : vector<1x128xf32>
    %195 = arith.mulf %0, %194 : vector<1x128xf32>
    %196 = arith.mulf %195, %34 : vector<1x128xf32>
    %c15 = arith.constant 15 : index
    %c0_78 = arith.constant 0 : index
    %c0_79 = arith.constant 0 : index
    %197 = vector.load %arg3[%c15, %c0_78, %c0_79] : memref<25x1x128xf32, #tpu.memory_space<vmem>>, vector<1x1x128xf32>
    %198 = vector.shape_cast %197 : vector<1x1x128xf32> to vector<1x128xf32>
    %199 = vector.shape_cast %196 : vector<1x128xf32> to vector<1x1x128xf32>
    tpu.vector_store %arg3[%c15, %c0_78, %c0_79], %199 {strides = array<i32>} : memref<25x1x128xf32, #tpu.memory_space<vmem>>, vector<1x1x128xf32>,
    %200 = arith.mulf %195, %62 : vector<1x128xf32>
    %c16 = arith.constant 16 : index
    %c0_80 = arith.constant 0 : index
    %c0_81 = arith.constant 0 : index
    %201 = vector.load %arg3[%c16, %c0_80, %c0_81] : memref<25x1x128xf32, #tpu.memory_space<vmem>>, vector<1x1x128xf32>
    %202 = vector.shape_cast %201 : vector<1x1x128xf32> to vector<1x128xf32>
    %203 = vector.shape_cast %200 : vector<1x128xf32> to vector<1x1x128xf32>
    tpu.vector_store %arg3[%c16, %c0_80, %c0_81], %203 {strides = array<i32>} : memref<25x1x128xf32, #tpu.memory_space<vmem>>, vector<1x1x128xf32>,
    %c17 = arith.constant 17 : index
    %c0_82 = arith.constant 0 : index
    %c0_83 = arith.constant 0 : index
    %204 = vector.load %arg3[%c17, %c0_82, %c0_83] : memref<25x1x128xf32, #tpu.memory_space<vmem>>, vector<1x1x128xf32>
    %205 = vector.shape_cast %204 : vector<1x1x128xf32> to vector<1x128xf32>
    %206 = vector.shape_cast %195 : vector<1x128xf32> to vector<1x1x128xf32>
    tpu.vector_store %arg3[%c17, %c0_82, %c0_83], %206 {strides = array<i32>} : memref<25x1x128xf32, #tpu.memory_space<vmem>>, vector<1x1x128xf32>,
    %207 = arith.mulf %195, %90 : vector<1x128xf32>
    %c18 = arith.constant 18 : index
    %c0_84 = arith.constant 0 : index
    %c0_85 = arith.constant 0 : index
    %208 = vector.load %arg3[%c18, %c0_84, %c0_85] : memref<25x1x128xf32, #tpu.memory_space<vmem>>, vector<1x1x128xf32>
    %209 = vector.shape_cast %208 : vector<1x1x128xf32> to vector<1x128xf32>
    %210 = vector.shape_cast %207 : vector<1x128xf32> to vector<1x1x128xf32>
    tpu.vector_store %arg3[%c18, %c0_84, %c0_85], %210 {strides = array<i32>} : memref<25x1x128xf32, #tpu.memory_space<vmem>>, vector<1x1x128xf32>,
    %211 = arith.mulf %195, %118 : vector<1x128xf32>
    %c19 = arith.constant 19 : index
    %c0_86 = arith.constant 0 : index
    %c0_87 = arith.constant 0 : index
    %212 = vector.load %arg3[%c19, %c0_86, %c0_87] : memref<25x1x128xf32, #tpu.memory_space<vmem>>, vector<1x1x128xf32>
    %213 = vector.shape_cast %212 : vector<1x1x128xf32> to vector<1x128xf32>
    %214 = vector.shape_cast %211 : vector<1x128xf32> to vector<1x1x128xf32>
    tpu.vector_store %arg3[%c19, %c0_86, %c0_87], %214 {strides = array<i32>} : memref<25x1x128xf32, #tpu.memory_space<vmem>>, vector<1x1x128xf32>,
    %cst_88 = arith.constant -2.100000e-01 : f32
    %215 = vector.broadcast %cst_88 : f32 to vector<1x128xf32>
    %216 = arith.mulf %215, %0 : vector<1x128xf32>
    %cst_89 = arith.constant 1.007950e+00 : f32
    %217 = vector.broadcast %cst_89 : f32 to vector<1x128xf32>
    %218 = arith.addf %217, %216 : vector<1x128xf32>
    %219 = arith.mulf %0, %218 : vector<1x128xf32>
    %220 = arith.mulf %219, %34 : vector<1x128xf32>
    %c20 = arith.constant 20 : index
    %c0_90 = arith.constant 0 : index
    %c0_91 = arith.constant 0 : index
    %221 = vector.load %arg3[%c20, %c0_90, %c0_91] : memref<25x1x128xf32, #tpu.memory_space<vmem>>, vector<1x1x128xf32>
    %222 = vector.shape_cast %221 : vector<1x1x128xf32> to vector<1x128xf32>
    %223 = vector.shape_cast %220 : vector<1x128xf32> to vector<1x1x128xf32>
    tpu.vector_store %arg3[%c20, %c0_90, %c0_91], %223 {strides = array<i32>} : memref<25x1x128xf32, #tpu.memory_space<vmem>>, vector<1x1x128xf32>,
    %224 = arith.mulf %219, %62 : vector<1x128xf32>
    %c21 = arith.constant 21 : index
    %c0_92 = arith.constant 0 : index
    %c0_93 = arith.constant 0 : index
    %225 = vector.load %arg3[%c21, %c0_92, %c0_93] : memref<25x1x128xf32, #tpu.memory_space<vmem>>, vector<1x1x128xf32>
    %226 = vector.shape_cast %225 : vector<1x1x128xf32> to vector<1x128xf32>
    %227 = vector.shape_cast %224 : vector<1x128xf32> to vector<1x1x128xf32>
    tpu.vector_store %arg3[%c21, %c0_92, %c0_93], %227 {strides = array<i32>} : memref<25x1x128xf32, #tpu.memory_space<vmem>>, vector<1x1x128xf32>,
    %c22 = arith.constant 22 : index
    %c0_94 = arith.constant 0 : index
    %c0_95 = arith.constant 0 : index
    %228 = vector.load %arg3[%c22, %c0_94, %c0_95] : memref<25x1x128xf32, #tpu.memory_space<vmem>>, vector<1x1x128xf32>
    %229 = vector.shape_cast %228 : vector<1x1x128xf32> to vector<1x128xf32>
    %230 = vector.shape_cast %219 : vector<1x128xf32> to vector<1x1x128xf32>
    tpu.vector_store %arg3[%c22, %c0_94, %c0_95], %230 {strides = array<i32>} : memref<25x1x128xf32, #tpu.memory_space<vmem>>, vector<1x1x128xf32>,
    %231 = arith.mulf %219, %90 : vector<1x128xf32>
    %c23 = arith.constant 23 : index
    %c0_96 = arith.constant 0 : index
    %c0_97 = arith.constant 0 : index
    %232 = vector.load %arg3[%c23, %c0_96, %c0_97] : memref<25x1x128xf32, #tpu.memory_space<vmem>>, vector<1x1x128xf32>
    %233 = vector.shape_cast %232 : vector<1x1x128xf32> to vector<1x128xf32>
    %234 = vector.shape_cast %231 : vector<1x128xf32> to vector<1x1x128xf32>
    tpu.vector_store %arg3[%c23, %c0_96, %c0_97], %234 {strides = array<i32>} : memref<25x1x128xf32, #tpu.memory_space<vmem>>, vector<1x1x128xf32>,
    %235 = arith.mulf %219, %118 : vector<1x128xf32>
    %c24 = arith.constant 24 : index
    %c0_98 = arith.constant 0 : index
    %c0_99 = arith.constant 0 : index
    %236 = vector.load %arg3[%c24, %c0_98, %c0_99] : memref<25x1x128xf32, #tpu.memory_space<vmem>>, vector<1x1x128xf32>
    %237 = vector.shape_cast %236 : vector<1x1x128xf32> to vector<1x128xf32>
    %238 = vector.shape_cast %235 : vector<1x128xf32> to vector<1x1x128xf32>
    tpu.vector_store %arg3[%c24, %c0_98, %c0_99], %238 {strides = array<i32>} : memref<25x1x128xf32, #tpu.memory_space<vmem>>, vector<1x1x128xf32>,
    return
  }
  func.func @transform_0(%arg0: i32) -> (i32, i32) {
    %c0_i32 = arith.constant 0 : i32
    %c0_i32_0 = arith.constant 0 : i32
    return %arg0, %c0_i32 : i32, i32
  }
  func.func @transform_1(%arg0: i32) -> (i32, i32) {
    %c0_i32 = arith.constant 0 : i32
    %c0_i32_0 = arith.constant 0 : i32
    return %arg0, %c0_i32 : i32, i32
  }
  func.func @transform_2(%arg0: i32) -> (i32, i32, i32) {
    %c0_i32 = arith.constant 0 : i32
    %c0_i32_0 = arith.constant 0 : i32
    %c0_i32_1 = arith.constant 0 : i32
    return %c0_i32, %arg0, %c0_i32_0 : i32, i32, i32
  }
}

</mosaic_0001>

<llo_original>
// kernel: tpu_custom_call.1
$region0: #{tpu_custom_call.1}
  #allocation0 [shape = 'u32[]', space=smem, size = 0x4, offset = 0x4, fixed_abs, tag = 'smem constant byte address 0x4 - core index']
  #allocation1 [shape = 'u32[144,128]{1,0:T(1,128)}', space=vmem, size = 0x12000, scoped, tag = 'internal scratch']
  %s0 = inlined_call_operand.hbm [shape: f32[1,128], index: 0, kind: input, shape index: {}]
  %s1 = inlined_call_operand.vmem [shape: f32[1,128], index: 1, kind: input, shape index: {}]
  %s2 = inlined_call_operand.hbm [shape: f32[25,1,128], index: 2, kind: output, shape index: {}]
  %s3 = sld [smem:[#allocation0]]
  $region22: #{tpu_custom_call.1} parent=0
    _
  %s5 = ssub.s32 1, %s3
  %s6 = scalar_select 0, %s5, %s3
  $region1: #{tpu_custom_call.1} parent=0
    #allocation2 [shape = 'u8[512]{0}', space=vmem, size = 0x400, scoped, tag = 'input window, operand 0, single buffered']
    #allocation3 [shape = 's32[1]{0}', space=sflag, size = 0x4, scoped, tag = 'scoped memory for tpu_custom_call.1']
    #allocation4 [shape = 's32[1]{0}', space=sflag, size = 0x4, scoped, tag = 'scoped memory for tpu_custom_call.1']
    #allocation5 [shape = 'u8[12800]{0}', space=vmem, size = 0x3400, scoped, tag = 'output window, operand 0, single buffered']
    %7 = vsyncpa [#allocation3], 0
    %8 = vsyncpa [#allocation4], 0
    // Predicated region
    $region2: #{tpu_custom_call.1} parent=1 // pred_check
      _
    $region3: #{tpu_custom_call.1} parent=1 // pred_check_branch
      %10 = sbr.rel (0) target = $region5
    $region4: #{tpu_custom_call.1} parent=1 // pred_region
      %s12 = ssub.s32 16, 16
      %13 = vsyncadd [#allocation3], %s12
      %s15 = sshll.u32 [#allocation2], 4
      %s16 = int_to_ptr.vmem [resolvable:$true] %s15
      %18 = dma.hbm_to_vmem [thread:$0]  %s0, 16, %s16, [#allocation3]
    $region5: #{tpu_custom_call.1} parent=1 // pred_fallthru
      _
    // Predicated region
    $region6: #{tpu_custom_call.1} parent=1 // pred_check
      _
    $region7: #{tpu_custom_call.1} parent=1 // pred_check_branch
      %20 = sbr.rel (0) target = $region9
    $region8: #{tpu_custom_call.1} parent=1 // pred_region
      _
    $region9: #{tpu_custom_call.1} parent=1 // pred_fallthru
      _
    // Predicated region
    $region10: #{tpu_custom_call.1} parent=1 // pred_check
      _
    $region11: #{tpu_custom_call.1} parent=1 // pred_check_branch
      %22 = sbr.rel (0) target = $region13
    $region12: #{tpu_custom_call.1} parent=1 // pred_region
      %23 = dma.done [#allocation3], 16
    $region13: #{tpu_custom_call.1} parent=1 // pred_fallthru
      _
    %v24 = vld [vmem:[#allocation2] sm:$0x1]
    %v25 = vld [vmem:[%s1] sm:$0x1]
    %v26 = vrcp.pop %v24
    %v27 = vmul.f32 %v24, %v26
    %v28 = vsub.f32 2.0, %v27
    %v29 = vmul.f32 %v26, %v28
    %v30 = vmul.f32 %v29, 0.10700248
    %v31 = vmul.f32 %v30, -1.4
    %v32 = vsub.f32 1.0, %v31
    %v33 = vmul.f32 %v30, %v30
    %v34 = vadd.f32 %v32, %v33
    %v35 = vrsqrt.pop %v34
    %v36 = vmul.f32 %v34, %v35
    %vm37 = vcmp.eq.f32.partialorder %v34, inf
    %v38 = vsel %vm37, %v34, %v36
    %vm39 = vcmp.eq.f32.partialorder %v34, 0.0
    %v40 = vand.u32 %v34, 2147483648
    %v41 = vsel %vm39, %v40, %v38
    %v42 = vadd.f32 %v41, %v30
    %v43 = vsub.f32 %v42, -0.7
    %v44 = vmul.f32 %v43, 0.5882353
    %v45 = vlog2.pop %v44
    %v46 = vmul.f32 %v45, 0.6931472
    %v47 = vadd.f32 %v46, 1e-08
    %v48 = vrcp.pop %v47
    %v49 = vmul.f32 %v47, %v48
    %v50 = vsub.f32 2.0, %v49
    %v51 = vmul.f32 %v48, %v50
    %v52 = vmul.f32 %v30, %v51
    %v53 = vmul.f32 %v25, 0.7
    %vm54 = vcmp.eq.f32.partialorder %v53, %v25
    %v55 = vsel %vm54, 1.0, %v52
    %v56 = vmul.f32 %v29, 0.04875568
    %v57 = vmul.f32 %v56, -1.4
    %v58 = vsub.f32 1.0, %v57
    %v59 = vmul.f32 %v56, %v56
    %v60 = vadd.f32 %v58, %v59
    %v61 = vrsqrt.pop %v60
    %v62 = vmul.f32 %v60, %v61
    %vm63 = vcmp.eq.f32.partialorder %v60, inf
    %v64 = vsel %vm63, %v60, %v62
    %vm65 = vcmp.eq.f32.partialorder %v60, 0.0
    %v66 = vand.u32 %v60, 2147483648
    %v67 = vsel %vm65, %v66, %v64
    %v68 = vadd.f32 %v67, %v56
    %v69 = vsub.f32 %v68, -0.7
    %v70 = vmul.f32 %v69, 0.5882353
    %v71 = vlog2.pop %v70
    %v72 = vmul.f32 %v71, 0.6931472
    %v73 = vadd.f32 %v72, 1e-08
    %v74 = vrcp.pop %v73
    %v75 = vmul.f32 %v73, %v74
    %v76 = vsub.f32 2.0, %v75
    %v77 = vmul.f32 %v74, %v76
    %v78 = vmul.f32 %v56, %v77
    %v79 = vmul.f32 %v25, 0.85
    %vm80 = vcmp.eq.f32.partialorder %v79, %v25
    %v81 = vsel %vm80, 1.0, %v78
    %v82 = vmul.f32 %v29, -0.041928582
    %v83 = vmul.f32 %v82, -1.4
    %v84 = vsub.f32 1.0, %v83
    %v85 = vmul.f32 %v82, %v82
    %v86 = vadd.f32 %v84, %v85
    %v87 = vrsqrt.pop %v86
    %v88 = vmul.f32 %v86, %v87
    %vm89 = vcmp.eq.f32.partialorder %v86, inf
    %v90 = vsel %vm89, %v86, %v88
    %vm91 = vcmp.eq.f32.partialorder %v86, 0.0
    %v92 = vand.u32 %v86, 2147483648
    %v93 = vsel %vm91, %v92, %v90
    %v94 = vadd.f32 %v93, %v82
    %v95 = vsub.f32 %v94, -0.7
    %v96 = vmul.f32 %v95, 0.5882353
    %v97 = vlog2.pop %v96
    %v98 = vmul.f32 %v97, 0.6931472
    %v99 = vadd.f32 %v98, 1e-08
    %v100 = vrcp.pop %v99
    %v101 = vmul.f32 %v99, %v100
    %v102 = vsub.f32 2.0, %v101
    %v103 = vmul.f32 %v100, %v102
    %v104 = vmul.f32 %v82, %v103
    %v105 = vmul.f32 %v25, 1.15
    %vm106 = vcmp.eq.f32.partialorder %v105, %v25
    %v107 = vsel %vm106, 1.0, %v104
    %v108 = vmul.f32 %v29, -0.07870928
    %v109 = vmul.f32 %v108, -1.4
    %v110 = vsub.f32 1.0, %v109
    %v111 = vmul.f32 %v108, %v108
    %v112 = vadd.f32 %v110, %v111
    %v113 = vrsqrt.pop %v112
    %v114 = vmul.f32 %v112, %v113
    %vm115 = vcmp.eq.f32.partialorder %v112, inf
    %v116 = vsel %vm115, %v112, %v114
    %vm117 = vcmp.eq.f32.partialorder %v112, 0.0
    %v118 = vand.u32 %v112, 2147483648
    %v119 = vsel %vm117, %v118, %v116
    %v120 = vadd.f32 %v119, %v108
    %v121 = vsub.f32 %v120, -0.7
    %v122 = vmul.f32 %v121, 0.5882353
    %v123 = vlog2.pop %v122
    %v124 = vmul.f32 %v123, 0.6931472
    %v125 = vadd.f32 %v124, 1e-08
    %v126 = vrcp.pop %v125
    %v127 = vmul.f32 %v125, %v126
    %v128 = vsub.f32 2.0, %v127
    %v129 = vmul.f32 %v126, %v128
    %v130 = vmul.f32 %v108, %v129
    %v131 = vmul.f32 %v25, 1.3
    %vm132 = vcmp.eq.f32.partialorder %v131, %v25
    %v133 = vsel %vm132, 1.0, %v130
    %v134 = vmul.f32 %v24, -0.0
    %v135 = vadd.f32 %v134, 1.0
    %v136 = vmul.f32 %v24, %v135
    %v137 = vmul.f32 %v136, %v55
    %138 = vst [vmem:[#allocation5] sm:$0x1] %v137
    %v139 = vmul.f32 %v136, %v81
    %s140 = scalar_lea.vmem [#allocation5], 1
    %141 = vst [vmem:[%s140] sm:$0x1] %v139
    %s142 = scalar_lea.vmem [#allocation5], 2
    %143 = vst [vmem:[%s142] sm:$0x1] %v136
    %v144 = vmul.f32 %v136, %v107
    %s145 = scalar_lea.vmem [#allocation5], 3
    %146 = vst [vmem:[%s145] sm:$0x1] %v144
    %v147 = vmul.f32 %v136, %v133
    %s148 = scalar_lea.vmem [#allocation5], 4
    %149 = vst [vmem:[%s148] sm:$0x1] %v147
    %v150 = vmul.f32 %v24, -0.0525
    %v151 = vadd.f32 %v150, 1.0019875
    %v152 = vmul.f32 %v24, %v151
    %v153 = vmul.f32 %v152, %v55
    %s154 = scalar_lea.vmem [#allocation5], 5
    %155 = vst [vmem:[%s154] sm:$0x1] %v153
    %v156 = vmul.f32 %v152, %v81
    %s157 = scalar_lea.vmem [#allocation5], 6
    %158 = vst [vmem:[%s157] sm:$0x1] %v156
    %s159 = scalar_lea.vmem [#allocation5], 7
    %160 = vst [vmem:[%s159] sm:$0x1] %v152
    %v161 = vmul.f32 %v152, %v107
    %s162 = scalar_lea.vmem [#allocation5], 8
    %163 = vst [vmem:[%s162] sm:$0x1] %v161
    %v164 = vmul.f32 %v152, %v133
    %s165 = scalar_lea.vmem [#allocation5], 9
    %166 = vst [vmem:[%s165] sm:$0x1] %v164
    %v167 = vmul.f32 %v24, -0.105
    %v168 = vadd.f32 %v167, 1.003975
    %v169 = vmul.f32 %v24, %v168
    %v170 = vmul.f32 %v169, %v55
    %s171 = scalar_lea.vmem [#allocation5], 10
    %172 = vst [vmem:[%s171] sm:$0x1] %v170
    %v173 = vmul.f32 %v169, %v81
    %s174 = scalar_lea.vmem [#allocation5], 11
    %175 = vst [vmem:[%s174] sm:$0x1] %v173
    %s176 = scalar_lea.vmem [#allocation5], 12
    %177 = vst [vmem:[%s176] sm:$0x1] %v169
    %v178 = vmul.f32 %v169, %v107
    %s179 = scalar_lea.vmem [#allocation5], 13
    %180 = vst [vmem:[%s179] sm:$0x1] %v178
    %v181 = vmul.f32 %v169, %v133
    %s182 = scalar_lea.vmem [#allocation5], 14
    %183 = vst [vmem:[%s182] sm:$0x1] %v181
    %v184 = vmul.f32 %v24, -0.1575
    %v185 = vadd.f32 %v184, 1.0059625
    %v186 = vmul.f32 %v24, %v185
    %v187 = vmul.f32 %v186, %v55
    %s188 = scalar_lea.vmem [#allocation5], 15
    %189 = vst [vmem:[%s188] sm:$0x1] %v187
    %v190 = vmul.f32 %v186, %v81
    %s191 = scalar_lea.vmem [#allocation5], 16
    %192 = vst [vmem:[%s191] sm:$0x1] %v190
    %s193 = scalar_lea.vmem [#allocation5], 17
    %194 = vst [vmem:[%s193] sm:$0x1] %v186
    %v195 = vmul.f32 %v186, %v107
    %s196 = scalar_lea.vmem [#allocation5], 18
    %197 = vst [vmem:[%s196] sm:$0x1] %v195
    %v198 = vmul.f32 %v186, %v133
    %s199 = scalar_lea.vmem [#allocation5], 19
    %200 = vst [vmem:[%s199] sm:$0x1] %v198
    %v201 = vmul.f32 %v24, -0.21
    %v202 = vadd.f32 %v201, 1.00795
    %v203 = vmul.f32 %v24, %v202
    %v204 = vmul.f32 %v203, %v55
    %s205 = scalar_lea.vmem [#allocation5], 20
    %206 = vst [vmem:[%s205] sm:$0x1] %v204
    %v207 = vmul.f32 %v203, %v81
    %s208 = scalar_lea.vmem [#allocation5], 21
    %209 = vst [vmem:[%s208] sm:$0x1] %v207
    %s210 = scalar_lea.vmem [#allocation5], 22
    %211 = vst [vmem:[%s210] sm:$0x1] %v203
    %v212 = vmul.f32 %v203, %v107
    %s213 = scalar_lea.vmem [#allocation5], 23
    %214 = vst [vmem:[%s213] sm:$0x1] %v212
    %v215 = vmul.f32 %v203, %v133
    %s216 = scalar_lea.vmem [#allocation5], 24
    %217 = vst [vmem:[%s216] sm:$0x1] %v215
    // Predicated region
    $region14: #{tpu_custom_call.1} parent=1 // pred_check
      _
    $region15: #{tpu_custom_call.1} parent=1 // pred_check_branch
      %219 = sbr.rel (0) target = $region17
    $region16: #{tpu_custom_call.1} parent=1 // pred_region
      %s221 = ssub.s32 400, 400
      %222 = vsyncadd [#allocation4], %s221
      %s223 = sshll.u32 [#allocation5], 4
      %s224 = int_to_ptr.vmem [resolvable:$true] %s223
      %229 = dma.vmem_to_hbm [thread:$0]  %s224, 400, %s2, [#allocation4], 16, 16, 1
    $region17: #{tpu_custom_call.1} parent=1 // pred_fallthru
      _
    // Predicated region
    $region18: #{tpu_custom_call.1} parent=1 // pred_check
      _
    $region19: #{tpu_custom_call.1} parent=1 // pred_check_branch
      %231 = sbr.rel (0) target = $region21
    $region20: #{tpu_custom_call.1} parent=1 // pred_region
      %232 = dma.done [#allocation4], 400
    $region21: #{tpu_custom_call.1} parent=1 // pred_fallthru
      _
    %233 = vsyncpa [#allocation3], 1
    %234 = vsyncpa [#allocation4], 1

</llo_original>
